<compile_context>
chip_gen: v7x
topology: tpu7x:2x2x1
jax: 0.10.0
libtpu: 0.0.40
codegen_flags: <defaults>
</compile_context>

<pallas_src>
from functools import partial

import jax
import jax.numpy as jnp
from jax.experimental import pallas as pl
from jax.experimental.pallas import tpu as pltpu


def _attention_kernel(valid_s, x_ref, w1_ref, b1_ref, w2_ref, out_ref):
    TB, S_pad, H = x_ref.shape
    D = w1_ref.shape[1]

    x = x_ref[...]                                   # (TB, S_pad, H), native dtype
    x2d = x.reshape(TB * S_pad, H)                   # free merge: S_pad % 8 == 0

    # Linear(H, 64) + ReLU -- one tall MXU matmul with f32 accumulation.
    h = jnp.dot(x2d, w1_ref[...], preferred_element_type=jnp.float32)
    h = jnp.maximum(h + b1_ref[...], 0.0)            # (TB*S_pad, 64) f32

    # Linear(64, 1) as a VPU broadcast-multiply + lane reduction (skip the
    # degenerate N=1 MXU matmul).  b2 is omitted: softmax is shift-invariant.
    e = jnp.sum(h.reshape(TB, S_pad, D) * w2_ref[...], axis=-1)   # (TB, S_pad)

    # Mask padded sequence positions (zero-padded rows would otherwise get a
    # finite constant energy and steal softmax mass).
    if valid_s != S_pad:
        pos = jax.lax.broadcasted_iota(jnp.int32, (TB, S_pad), 1)
        e = jnp.where(pos < valid_s, e, -jnp.inf)

    # Exact softmax over the sequence (lane) axis -- no approximate reciprocal.
    m = jnp.max(e, axis=-1, keepdims=True)           # (TB, 1)
    p = jnp.exp(e - m)                               # (TB, S_pad)
    w = p * (1.0 / jnp.sum(p, axis=-1, keepdims=True))

    # Weighted sum over the sequence axis.  Multiply in x's dtype so a bf16
    # input never materializes a full-block f32 copy of x (jnp.sum still
    # accumulates low-precision products in f32).
    out = jnp.sum(x * w[..., None].astype(x.dtype), axis=1)       # (TB, H)
    out_ref[...] = out.astype(out_ref.dtype)


def _choose_tb(B, S_pad, H, itemsize):
    """Batch rows per grid step, budgeted in (8,128)-padded VMEM bytes."""
    lane_h = pl.cdiv(H, 128) * 128                   # last dim pads to 128 lanes
    row_x = S_pad * lane_h * itemsize                # one batch row of the x tile
    row_f32 = S_pad * lane_h * 4                     # f32-sized temporaries
    # Per-step working set ~= 2*x (double-buffered) + ~3 f32-sized temps
    # (h tile, h*w2 product, x*w product).  Keep it under ~32 MiB so the whole
    # scope fits the 48 MiB limit we request (v7x: 64 MiB physical VMEM;
    # v5e/v6e could go bigger, but this already yields MiB-scale HBM blocks).
    budget = 32 * 1024 * 1024
    tb_cap = max(1, budget // (2 * row_x + 3 * row_f32))
    if tb_cap >= B:
        # Whole batch fits in one step.  Still split into 2 steps for larger
        # batches so both v7x TensorCores get work; on 1-TC v5e/v6e this costs
        # only one extra ~0.35 us step and at most one padded row.
        return B if B < 16 else pl.cdiv(B, 2)
    # Minimal number of steps respecting the VMEM cap, split evenly so that
    # batch padding stays minimal.
    nsteps = pl.cdiv(B, tb_cap)
    return pl.cdiv(B, nsteps)


@partial(jax.jit, static_argnames=("compute_dtype",))
def attention_forward(x, w1, b1, w2, *, compute_dtype=None):
    """x: (B, S, H); w1: (H, 64); b1: (1, 64); w2: (1, 64).  Returns (B, H).

    compute_dtype=jnp.bfloat16 casts x/w1 before the kernel (halves HBM
    traffic on v6e/v7x); the default keeps the exact f32 path.
    """
    orig_dtype = x.dtype
    if compute_dtype is not None:
        x = x.astype(compute_dtype)
        w1 = w1.astype(compute_dtype)

    B, S, H = x.shape
    D = w1.shape[1]

    # Pad S to a multiple of 8 so in-kernel leading-dim reshapes are free.
    S_pad = pl.cdiv(S, 8) * 8
    if S_pad != S:
        x = jnp.pad(x, ((0, 0), (0, S_pad - S), (0, 0)))

    TB = _choose_tb(B, S_pad, H, x.dtype.itemsize)
    G = pl.cdiv(B, TB)
    Bp = G * TB
    if Bp != B:
        # Zero-pad the batch; padded rows produce finite values we slice off.
        x = jnp.pad(x, ((0, Bp - B), (0, 0), (0, 0)))

    out3 = pl.pallas_call(
        partial(_attention_kernel, S),
        out_shape=jax.ShapeDtypeStruct((G, TB, H), x.dtype),
        grid_spec=pltpu.PrefetchScalarGridSpec(
            num_scalar_prefetch=0,
            grid=(G,),
            in_specs=[
                pl.BlockSpec((TB, S_pad, H), lambda b: (b, 0, 0)),  # x slab
                pl.BlockSpec((H, D), lambda b: (0, 0)),             # W1 (resident)
                pl.BlockSpec((1, D), lambda b: (0, 0)),             # b1
                pl.BlockSpec((1, D), lambda b: (0, 0)),             # w2 (row vec)
            ],
            out_specs=pl.BlockSpec((None, TB, H), lambda b: (b, 0, 0)),
        ),
        compiler_params=pltpu.CompilerParams(
            dimension_semantics=("parallel",),
            vmem_limit_bytes=48 * 1024 * 1024,
        ),
    )(x, w1, b1, w2)

    out = out3.reshape(Bp, H)[:B]
    return out.astype(orig_dtype)


def reference_forward(x, w1, b1, w2, b2):
    """Pure-JAX reference matching the PyTorch semantics (b2 included)."""
    h = jnp.maximum(jnp.einsum("bsh,hd->bsd", x, w1) + b1, 0.0)   # (B, S, 64)
    e = jnp.einsum("bsd,d->bs", h, w2[0]) + b2                    # (B, S)
    w = jax.nn.softmax(e, axis=1)
    return jnp.sum(x * w[..., None], axis=1)                      # (B, H)


if __name__ == "__main__":
    def run_case(key, B, S, H, D=64, compute_dtype=None, atol=1e-4, rtol=1e-4):
        kx, k1, k2, k3, k4 = jax.random.split(key, 5)
        lim1 = 1.0 / jnp.sqrt(H)
        lim2 = 1.0 / jnp.sqrt(D)
        x = jax.random.normal(kx, (B, S, H), dtype=jnp.float32)
        w1 = jax.random.uniform(k1, (H, D), jnp.float32, -lim1, lim1)
        b1 = jax.random.uniform(k2, (1, D), jnp.float32, -lim1, lim1)
        w2 = jax.random.uniform(k3, (1, D), jnp.float32, -lim2, lim2)
        b2 = jax.random.uniform(k4, (), jnp.float32, -lim2, lim2)

        out = jax.block_until_ready(
            attention_forward(x, w1, b1, w2, compute_dtype=compute_dtype))
        ref = reference_forward(x, w1, b1, w2, b2)
        assert out.shape == (B, H)
        assert jnp.allclose(out, ref, atol=atol, rtol=rtol), \
            float(jnp.max(jnp.abs(out - ref)))

    key = jax.random.PRNGKey(0)
    k0, k1, k2, k3, k4 = jax.random.split(key, 5)

    # small shapes from the module spec (single-step grid path)
    run_case(k0, B=2, S=8, H=32)
    # the previously failing case: multi-step grid, exact softmax now
    run_case(k1, B=24, S=16, H=32)
    # sequence padding + -inf masking path (S not a multiple of 8)
    run_case(k2, B=24, S=10, H=32)
    # odd batch -> 2-step split with one zero-padded batch row
    run_case(k3, B=19, S=8, H=32)
    # reduced-precision bf16 input path (halves HBM traffic on v6e/v7x)
    run_case(k4, B=24, S=16, H=32, compute_dtype=jnp.bfloat16, atol=1e-1, rtol=1e-1)

    print("KERNEL_OK")
</pallas_src>

<mosaic_0001>
module attributes {stable_mosaic.version = 11 : i64} {
  func.func @_attention_kernel(%arg0: i32, %arg1: memref<2x8x32xf32, #tpu.memory_space<vmem>>, %arg2: memref<32x64xf32, #tpu.memory_space<vmem>>, %arg3: memref<1x64xf32, #tpu.memory_space<vmem>>, %arg4: memref<1x64xf32, #tpu.memory_space<vmem>>, %arg5: memref<1x2x32xf32, #tpu.memory_space<vmem>>) attributes {dimension_semantics = [#tpu.dimension_semantics<parallel>], iteration_bounds = array<i64: 1>, scalar_prefetch = 0 : i64, scratch_operands = 0 : i64, tpu.core_type = #tpu.core_type<tc>, window_params = [{transform_indices = @transform_0, window_bounds = array<i64: 2, 8, 32>}, {pipeline_mode = #tpu.pipeline_mode<synchronous>, transform_indices = @transform_1, window_bounds = array<i64: 32, 64>}, {pipeline_mode = #tpu.pipeline_mode<synchronous>, transform_indices = @transform_2, window_bounds = array<i64: 1, 64>}, {pipeline_mode = #tpu.pipeline_mode<synchronous>, transform_indices = @transform_3, window_bounds = array<i64: 1, 64>}, {transform_indices = @transform_4, window_bounds = array<i64: 1, 2, 32>}]} {
    %c0 = arith.constant 0 : index
    %c0_0 = arith.constant 0 : index
    %c0_1 = arith.constant 0 : index
    %0 = vector.load %arg1[%c0, %c0_0, %c0_1] : memref<2x8x32xf32, #tpu.memory_space<vmem>>, vector<2x8x32xf32>
    %1 = vector.shape_cast %0 : vector<2x8x32xf32> to vector<16x32xf32>
    %c0_2 = arith.constant 0 : index
    %c0_3 = arith.constant 0 : index
    %2 = vector.load %arg2[%c0_2, %c0_3] : memref<32x64xf32, #tpu.memory_space<vmem>>, vector<32x64xf32>
    %cst = arith.constant dense<0.000000e+00> : vector<16x64xf32>
    %3 = tpu.matmul %1, %2, %cst {dimension_numbers = #tpu.dot_dimension_numbers<[1], [0], [0], [1], [0, 0, 1, 1], [], []>} : vector<16x32xf32>, vector<32x64xf32>, vector<16x64xf32> -> vector<16x64xf32>
    %c0_4 = arith.constant 0 : index
    %c0_5 = arith.constant 0 : index
    %4 = vector.load %arg3[%c0_4, %c0_5] : memref<1x64xf32, #tpu.memory_space<vmem>>, vector<1x64xf32>
    %5 = vector.broadcast %4 : vector<1x64xf32> to vector<16x64xf32>
    %6 = arith.addf %3, %5 : vector<16x64xf32>
    %cst_6 = arith.constant 0.000000e+00 : f32
    %7 = vector.broadcast %cst_6 : f32 to vector<16x64xf32>
    %8 = arith.maximumf %6, %7 : vector<16x64xf32>
    %9 = vector.shape_cast %8 : vector<16x64xf32> to vector<2x8x64xf32>
    %c0_7 = arith.constant 0 : index
    %c0_8 = arith.constant 0 : index
    %10 = vector.load %arg4[%c0_7, %c0_8] : memref<1x64xf32, #tpu.memory_space<vmem>>, vector<1x64xf32>
    %11 = vector.shape_cast %10 : vector<1x64xf32> to vector<1x1x64xf32>
    %12 = vector.broadcast %11 : vector<1x1x64xf32> to vector<2x8x64xf32>
    %13 = arith.mulf %9, %12 : vector<2x8x64xf32>
    %cst_9 = arith.constant dense<0.000000e+00> : vector<2x8xf32>
    %14 = vector.multi_reduction <add>, %13, %cst_9 [2] : vector<2x8x64xf32> to vector<2x8xf32>
    %cst_10 = arith.constant dense<0xFF800000> : vector<2xf32>
    %15 = vector.multi_reduction <maximumf>, %14, %cst_10 [1] : vector<2x8xf32> to vector<2xf32>
    %16 = vector.shape_cast %15 : vector<2xf32> to vector<2x1xf32>
    %17 = vector.broadcast %16 : vector<2x1xf32> to vector<2x8xf32>
    %18 = arith.subf %14, %17 : vector<2x8xf32>
    %19 = math.exp %18 : vector<2x8xf32>
    %cst_11 = arith.constant dense<0.000000e+00> : vector<2xf32>
    %20 = vector.multi_reduction <add>, %19, %cst_11 [1] : vector<2x8xf32> to vector<2xf32>
    %21 = vector.shape_cast %20 : vector<2xf32> to vector<2x1xf32>
    %cst_12 = arith.constant 1.000000e+00 : f32
    %22 = vector.broadcast %cst_12 : f32 to vector<2x1xf32>
    %23 = arith.divf %22, %21 : vector<2x1xf32>
    %24 = vector.broadcast %23 : vector<2x1xf32> to vector<2x8xf32>
    %25 = arith.mulf %19, %24 : vector<2x8xf32>
    %26 = vector.shape_cast %25 : vector<2x8xf32> to vector<2x8x1xf32>
    %27 = vector.broadcast %26 : vector<2x8x1xf32> to vector<2x8x32xf32>
    %28 = arith.mulf %0, %27 : vector<2x8x32xf32>
    %cst_13 = arith.constant dense<0.000000e+00> : vector<2x32xf32>
    %29 = vector.multi_reduction <add>, %28, %cst_13 [1] : vector<2x8x32xf32> to vector<2x32xf32>
    %c0_14 = arith.constant 0 : index
    %c0_15 = arith.constant 0 : index
    %c0_16 = arith.constant 0 : index
    %30 = vector.load %arg5[%c0_14, %c0_15, %c0_16] : memref<1x2x32xf32, #tpu.memory_space<vmem>>, vector<1x2x32xf32>
    %31 = vector.shape_cast %30 : vector<1x2x32xf32> to vector<2x32xf32>
    %32 = vector.shape_cast %29 : vector<2x32xf32> to vector<1x2x32xf32>
    tpu.vector_store %arg5[%c0_14, %c0_15, %c0_16], %32 {strides = array<i32>} : memref<1x2x32xf32, #tpu.memory_space<vmem>>, vector<1x2x32xf32>,
    return
  }
  func.func @transform_0(%arg0: i32) -> (i32, i32, i32) {
    %c0_i32 = arith.constant 0 : i32
    %c0_i32_0 = arith.constant 0 : i32
    %c0_i32_1 = arith.constant 0 : i32
    return %arg0, %c0_i32, %c0_i32_0 : i32, i32, i32
  }
  func.func @transform_1(%arg0: i32) -> (i32, i32) {
    %c0_i32 = arith.constant 0 : i32
    %c0_i32_0 = arith.constant 0 : i32
    %c0_i32_1 = arith.constant 0 : i32
    return %c0_i32, %c0_i32_0 : i32, i32
  }
  func.func @transform_2(%arg0: i32) -> (i32, i32) {
    %c0_i32 = arith.constant 0 : i32
    %c0_i32_0 = arith.constant 0 : i32
    %c0_i32_1 = arith.constant 0 : i32
    return %c0_i32, %c0_i32_0 : i32, i32
  }
  func.func @transform_3(%arg0: i32) -> (i32, i32) {
    %c0_i32 = arith.constant 0 : i32
    %c0_i32_0 = arith.constant 0 : i32
    %c0_i32_1 = arith.constant 0 : i32
    return %c0_i32, %c0_i32_0 : i32, i32
  }
  func.func @transform_4(%arg0: i32) -> (i32, i32, i32) {
    %c0_i32 = arith.constant 0 : i32
    %c0_i32_0 = arith.constant 0 : i32
    %c0_i32_1 = arith.constant 0 : i32
    return %arg0, %c0_i32, %c0_i32_0 : i32, i32, i32
  }
}

</mosaic_0001>

<llo_original>
// kernel: attention_forward.1
$region0: #{attention_forward.1}
  #allocation0 [shape = 'u32[]', space=smem, size = 0x4, offset = 0x4, fixed_abs, tag = 'smem constant byte address 0x4 - core index']
  #allocation1 [shape = 'u32[144,128]{1,0:T(1,128)}', space=vmem, size = 0x12000, scoped, tag = 'internal scratch']
  %s0 = inlined_call_operand.hbm [shape: f32[2,8,32], index: 0, kind: input, shape index: {}]
  %s1 = inlined_call_operand.hbm [shape: f32[32,64], index: 1, kind: input, shape index: {}]
  %s2 = inlined_call_operand.vmem [shape: f32[1,64], index: 2, kind: input, shape index: {}]
  %s3 = inlined_call_operand.vmem [shape: f32[1,64], index: 3, kind: input, shape index: {}]
  %s4 = inlined_call_operand.hbm [shape: f32[1,2,32], index: 4, kind: output, shape index: {}]
  %s5 = sld [smem:[#allocation0]]
  $region34: #{attention_forward.1} parent=0
    _
  %s7 = ssub.s32 1, %s5
  %s8 = scalar_select 0, %s7, %s5
  $region1: #{attention_forward.1} parent=0
    #allocation2 [shape = 'u8[8192]{0}', space=vmem, size = 0x2000, scoped, tag = 'input window, operand 0, single buffered']
    #allocation3 [shape = 's32[1]{0}', space=sflag, size = 0x4, scoped, tag = 'scoped memory for attention_forward.1']
    #allocation4 [shape = 's32[1]{0}', space=sflag, size = 0x4, scoped, tag = 'scoped memory for attention_forward.1']
    #allocation5 [shape = 'u8[16384]{0}', space=vmem, size = 0x4000, scoped, tag = 'input window, operand 1, single buffered']
    #allocation6 [shape = 's32[1]{0}', space=sflag, size = 0x4, scoped, tag = 'scoped memory for attention_forward.1']
    #allocation7 [shape = 'u8[1024]{0}', space=vmem, size = 0x400, scoped, tag = 'output window, operand 0, single buffered']
    %9 = vsyncpa [#allocation3], 0
    %10 = vsyncpa [#allocation6], 0
    %11 = vsyncpa [#allocation4], 0
    // Predicated region
    $region2: #{attention_forward.1} parent=1 // pred_check
      _
    $region3: #{attention_forward.1} parent=1 // pred_check_branch
      %13 = sbr.rel (0) target = $region5
    $region4: #{attention_forward.1} parent=1 // pred_region
      %s15 = ssub.s32 256, 256
      %16 = vsyncadd [#allocation3], %s15
      %s17 = sshll.u32 [#allocation2], 4
      %s18 = int_to_ptr.vmem [resolvable:$true] %s17
      %23 = dma.hbm_to_vmem [thread:$0]  %s0, 256, %s18, [#allocation3], 128, 128, 8
    $region5: #{attention_forward.1} parent=1 // pred_fallthru
      _
    // Predicated region
    $region6: #{attention_forward.1} parent=1 // pred_check
      _
    $region7: #{attention_forward.1} parent=1 // pred_check_branch
      %25 = sbr.rel (0) target = $region9
    $region8: #{attention_forward.1} parent=1 // pred_region
      %s27 = ssub.s32 512, 512
      %28 = vsyncadd [#allocation6], %s27
      %s29 = sshll.u32 [#allocation5], 4
      %s30 = int_to_ptr.vmem [resolvable:$true] %s29
      %35 = dma.hbm_to_vmem [thread:$0]  %s1, 512, %s30, [#allocation6], 128, 128, 8
    $region9: #{attention_forward.1} parent=1 // pred_fallthru
      _
    // Predicated region
    $region10: #{attention_forward.1} parent=1 // pred_check
      _
    $region11: #{attention_forward.1} parent=1 // pred_check_branch
      %37 = sbr.rel (0) target = $region13
    $region12: #{attention_forward.1} parent=1 // pred_region
      _
    $region13: #{attention_forward.1} parent=1 // pred_fallthru
      _
    // Predicated region
    $region14: #{attention_forward.1} parent=1 // pred_check
      _
    $region15: #{attention_forward.1} parent=1 // pred_check_branch
      %39 = sbr.rel (0) target = $region17
    $region16: #{attention_forward.1} parent=1 // pred_region
      _
    $region17: #{attention_forward.1} parent=1 // pred_fallthru
      _
    // Predicated region
    $region18: #{attention_forward.1} parent=1 // pred_check
      _
    $region19: #{attention_forward.1} parent=1 // pred_check_branch
      %41 = sbr.rel (0) target = $region21
    $region20: #{attention_forward.1} parent=1 // pred_region
      %42 = dma.done [#allocation3], 256
    $region21: #{attention_forward.1} parent=1 // pred_fallthru
      _
    // Predicated region
    $region22: #{attention_forward.1} parent=1 // pred_check
      _
    $region23: #{attention_forward.1} parent=1 // pred_check_branch
      %44 = sbr.rel (0) target = $region25
    $region24: #{attention_forward.1} parent=1 // pred_region
      %45 = dma.done [#allocation6], 512
    $region25: #{attention_forward.1} parent=1 // pred_fallthru
      _
    %v46 = vld [vmem:[#allocation2] sm:$0xff]
    %v47 = vld [vmem:[#allocation2 + $0x8] sm:$0xff]
    %v48 = vld [vmem:[#allocation5] sm:$0xff]
    %v49 = vld [vmem:[#allocation5 + $0x8] sm:$0xff]
    %v50 = vld [vmem:[#allocation5 + $0x10] sm:$0xff]
    %v51 = vld [vmem:[#allocation5 + $0x18] sm:$0xff]
    %v52 = vld [vmem:[%s2] sm:$0x1]
    %v54 = vlaneseq
    %v55 = vshrl.u32 %v54, 7
    %v56 = vsub.s32 0, %v55
    %v57 = vrot.slane %v52, %v56
    %vm59 = vcmask 261120
    %v61 = vsel %vm59, %v46, 0
    %v64 = vsel %vm59, %v47, 0
    %66 = vmatprep.subr.mxu0 0.0
    %67 = vmatpush1.msra.mxu0 %v48
    %68 = vmatprep.subr.mxu0 0.0
    %69 = vmatpush1.msra.mxu0 %v49
    %70 = vmatprep.subr.mxu0 0.0
    %71 = vmatpush1.msra.mxu0 %v50
    %72 = vmatprep.subr.mxu0 0.0
    %73 = vmatpush1.msra.mxu0 %v51
    %74 = vmatprep.subr.mxu0 0.0
    %75 = vmatpush1.msra.mxu0 0.0
    %76 = vmatprep.subr.mxu0 0.0
    %77 = vmatpush1.msra.mxu0 0.0
    %78 = vmatprep.subr.mxu0 0.0
    %79 = vmatpush1.msra.mxu0 0.0
    %80 = vmatprep.subr.mxu0 0.0
    %81 = vmatpush1.msra.mxu0 0.0
    %82 = vmatprep.subr.mxu0 0.0
    %83 = vmatpush1.msra.mxu0 0.0
    %84 = vmatprep.subr.mxu0 0.0
    %85 = vmatpush1.msra.mxu0 0.0
    %86 = vmatprep.subr.mxu0 0.0
    %87 = vmatpush1.msra.mxu0 0.0
    %88 = vmatprep.subr.mxu0 0.0
    %89 = vmatpush1.msra.mxu0 0.0
    %90 = vmatprep.subr.mxu0 0.0
    %91 = vmatpush1.msra.mxu0 0.0
    %92 = vmatprep.subr.mxu0 0.0
    %93 = vmatpush1.msra.mxu0 0.0
    %94 = vmatprep.subr.mxu0 0.0
    %95 = vmatpush1.msra.mxu0 0.0
    %96 = vmatprep.subr.mxu0 0.0
    %97 = vmatpush1.msra.mxu0 0.0
    %98 = vmatprep.subr.mxu0 0.0
    %99 = vmatpush1.msra.mxu0 0.0
    %100 = vmatprep.subr.mxu0 0.0
    %101 = vmatpush1.msra.mxu0 0.0
    %102 = vmatprep.subr.mxu0 0.0
    %103 = vmatpush1.msra.mxu0 0.0
    %104 = vmatprep.subr.mxu0 0.0
    %105 = vmatpush1.msra.mxu0 0.0
    %106 = vmatprep.subr.mxu0 0.0
    %107 = vmatpush1.msra.mxu0 0.0
    %108 = vmatprep.subr.mxu0 0.0
    %109 = vmatpush1.msra.mxu0 0.0
    %110 = vmatprep.subr.mxu0 0.0
    %111 = vmatpush1.msra.mxu0 0.0
    %112 = vmatprep.subr.mxu0 0.0
    %113 = vmatpush1.msra.mxu0 0.0
    %114 = vmatprep.subr.mxu0 0.0
    %115 = vmatpush1.msra.mxu0 0.0
    %116 = vmatprep.subr.mxu0 0.0
    %117 = vmatpush1.msra.mxu0 0.0
    %118 = vmatprep.subr.mxu0 0.0
    %119 = vmatpush1.msra.mxu0 0.0
    %120 = vmatprep.subr.mxu0 0.0
    %121 = vmatpush1.msra.mxu0 0.0
    %122 = vmatprep.subr.mxu0 0.0
    %123 = vmatpush1.msra.mxu0 0.0
    %124 = vmatprep.subr.mxu0 0.0
    %125 = vmatpush1.msra.mxu0 0.0
    %126 = vmatprep.subr.mxu0 0.0
    %127 = vmatpush1.msra.mxu0 0.0
    %128 = vmatprep.subr.mxu0 0.0
    %129 = vmatpush1.msra.mxu0 0.0
    %130 = vmatprep.mubr.f32.mxu0 0.0
    %131 = vmatmul.mubr.f32.gmra.mrb[0].mxu0 %v61
    %v132 = vpop.f32.mrb[0].mxu0
    %v133 = vadd.f32 %v57, %v132
    %v134 = vpop.f32.mrb[0].mxu0
    %135 = vmatprep.mubr.f32.mxu0 0.0
    %136 = vmatmul.mubr.f32.gmra.mrb[0].mxu0 %v64
    %v137 = vpop.f32.mrb[0].mxu0
    %v138 = vadd.f32 %v57, %v137
    %v139 = vpop.f32.mrb[0].mxu0
    %140 = vdwg.mxu0
    %v141 = vmax.f32 %v133, 0.0
    %v142 = vmax.f32 %v138, 0.0
    %v143 = vld [vmem:[%s3] sm:$0x1]
    %v145 = vlaneseq
    %v146 = vshrl.u32 %v145, 7
    %v147 = vsub.s32 0, %v146
    %v148 = vrot.slane %v143, %v147
    %v150 = vmul.f32 %v141, %v148
    %v151 = vmul.f32 %v142, %v148
    %vm152 = vcmask 523264
    %v153 = vsel %vm152, %v150, 0.0
    %154 = vadd.xlane.f32.xlu0 %v153
    %v155 = vpop.xlane.xlu0 %154
    %v156 = vsel %vm152, %v151, 0.0
    %157 = vadd.xlane.f32.xlu0 %v156
    %v158 = vpop.xlane.xlu0 %157
    %v161 = vlaneseq
    %v162 = vand.u32 %v161, 127
    %v163 = vlaneseq
    %v164 = vshrl.u32 %v163, 7
    %v165 = vsub.s32 %v162, %v164
    %v166 = vrot.slane %v155, %v165
    %v167 = vlaneseq
    %v168 = vshrl.u32 %v167, 7
    %v169 = vsub.s32 %v162, %v168
    %v170 = vrot.slane %v158, %v169
    %vm171 = vcmask 1041409
    %v172 = vsel %vm171, %v170, %v166
    %vm174 = vcmask 58368
    %v175 = vsel %vm174, %v172, -inf
    %176 = vmax.xlane.f32.xlu0 %v175
    %v177 = vpop.xlane.xlu0 %176
    %v179 = vlaneseq
    %v180 = vshrl.u32 %v179, 7
    %v181 = vsub.s32 0, %v180
    %v182 = vrot.slane %v177, %v181
    %v183 = vlaneseq
    %v184 = vshrl.u32 %v183, 7
    %v185 = vsub.s32 1, %v184
    %v186 = vrot.slane %v177, %v185
    %v189 = vsub.f32 %v155, %v182
    %v190 = vsub.f32 %v158, %v186
    %v191 = vmul.f32 %v189, 1.442695
    %v192 = vpow.pop %v191
    %v193 = vmul.f32 %v190, 1.442695
    %v194 = vpow.pop %v193
    %197 = vset.pattern.permute.xlu0 0
    %198 = vperm.xlu0 %197, %v192
    %v199 = vpop.permute.xlu0 %198
    %200 = vset.pattern.permute.xlu0 0
    %201 = vperm.xlu0 %200, %v194
    %v202 = vpop.permute.xlu0 %201
    %v203 = vlaneseq
    %v204 = vshrl.u32 %v203, 7
    %v205 = vsub.s32 %v162, %v204
    %v206 = vrot.slane %v199, %v205
    %v207 = vlaneseq
    %v208 = vshrl.u32 %v207, 7
    %v209 = vsub.s32 %v162, %v208
    %v210 = vrot.slane %v202, %v209
    %v211 = vsel %vm171, %v210, %v206
    %v213 = vsel %vm174, %v211, 0.0
    %214 = vadd.xlane.f32.xlu0 %v213
    %v215 = vpop.xlane.xlu0 %214
    %v216 = vrcp.pop %v215
    %v217 = vmul.f32 1.0, %v216
    %v219 = vlaneseq
    %v220 = vshrl.u32 %v219, 7
    %v221 = vsub.s32 0, %v220
    %v222 = vrot.slane %v217, %v221
    %v223 = vlaneseq
    %v224 = vshrl.u32 %v223, 7
    %v225 = vsub.s32 1, %v224
    %v226 = vrot.slane %v217, %v225
    %v229 = vmul.f32 %v192, %v222
    %v230 = vmul.f32 %v194, %v226
    %232 = vset.pattern.permute.xlu0 0
    %233 = vperm.xlu0 %232, %v229
    %v234 = vpop.permute.xlu0 %233
    %237 = vset.pattern.permute.xlu0 0
    %238 = vperm.xlu0 %237, %v230
    %v239 = vpop.permute.xlu0 %238
    %v241 = vmul.f32 %v46, %v234
    %v242 = vmul.f32 %v47, %v239
    %v243 = vsel %vm59, %v241, 0.0
    %v244 = vrot.slane %v243, 4
    %v245 = vadd.f32 %v243, %v244
    %v246 = vrot.slane %v245, 2
    %v247 = vadd.f32 %v245, %v246
    %v248 = vrot.slane %v247, 1
    %v249 = vadd.f32 %v247, %v248
    %v250 = vsel %vm59, %v242, 0.0
    %v251 = vrot.slane %v250, 4
    %v252 = vadd.f32 %v250, %v251
    %v253 = vrot.slane %v252, 2
    %v254 = vadd.f32 %v252, %v253
    %v255 = vrot.slane %v254, 1
    %v256 = vadd.f32 %v254, %v255
    %v259 = vsel %vm171, %v256, %v249
    %vm261 = vcmask 254976
    %262 = vst.msk [vmem:[#allocation7] sm:$0x3] %vm261, %v259
    // Predicated region
    $region26: #{attention_forward.1} parent=1 // pred_check
      _
    $region27: #{attention_forward.1} parent=1 // pred_check_branch
      %264 = sbr.rel (0) target = $region29
    $region28: #{attention_forward.1} parent=1 // pred_region
      %s266 = ssub.s32 32, 32
      %267 = vsyncadd [#allocation4], %s266
      %s269 = sshll.u32 [#allocation7], 4
      %s270 = int_to_ptr.vmem [resolvable:$true] %s269
      %272 = dma.vmem_to_hbm [thread:$0]  %s270, 32, %s4, [#allocation4]
    $region29: #{attention_forward.1} parent=1 // pred_fallthru
      _
    // Predicated region
    $region30: #{attention_forward.1} parent=1 // pred_check
      _
    $region31: #{attention_forward.1} parent=1 // pred_check_branch
      %274 = sbr.rel (0) target = $region33
    $region32: #{attention_forward.1} parent=1 // pred_region
      %275 = dma.done [#allocation4], 32
    $region33: #{attention_forward.1} parent=1 // pred_fallthru
      _
    %276 = vsyncpa [#allocation3], 1
    %277 = vsyncpa [#allocation6], 1
    %278 = vsyncpa [#allocation4], 1

</llo_original>
